<compile_context>
chip_gen: v7x
topology: tpu7x:2x2x1
jax: 0.10.0
libtpu: 0.0.40
codegen_flags: <defaults>
</compile_context>

<pallas_src>
import jax
import jax.numpy as jnp
from jax.experimental import pallas as pl
from jax.experimental.pallas import tpu as pltpu


def _round_up(x, m):
    return (x + m - 1) // m * m


def _pick_tiling(N, B, lane_tile):
    """Pick (tN, N_pad): minimal padding first, then >=2 grid steps, then size."""
    N128 = _round_up(N, 128)
    lane_tile = max(128, (lane_tile // 128) * 128)
    best_key, best = None, (128, N128)
    t = 128
    while t <= min(lane_tile, N128):
        n_pad = _round_up(N128, t)
        waste = n_pad - N128
        steps = B * (n_pad // t)
        key = (waste, 0 if steps >= 2 else 1, -t)
        if best_key is None or key < best_key:
            best_key, best = key, (t, n_pad)
        t += 128
    return best


def _upconv_linear_kernel(x_ref, w_ref, b_ref, o_ref):
    # x_ref: [C_in, tN]   w_ref: [7*C_out, C_in]   b_ref: [7*C_out, 1]
    # o_ref: [7*C_out, tN]  (rows pre-permuted to c*7 + k, vertices on lanes)
    o_ref[...] = (
        jnp.dot(w_ref[...], x_ref[...], preferred_element_type=jnp.float32)
        + b_ref[...]
    ).astype(o_ref.dtype)


def upconv_layer_batch_fwd(x, weight, bias, upconv_top_index, upconv_down_index,
                           *, lane_tile=1024):
    """Forward of upconv_layer_batch.

    x:      [B, C_in, N]            (PyTorch layout)
    weight: [7*C_out, C_in]         (torch nn.Linear weight, stored [out, in])
    bias:   [7*C_out]
    upconv_top_index:  [N]          int indices into [0, 7N)
    upconv_down_index: [2*(3N-6)]   int indices into [0, 7N)
    returns [B, C_out, 4N-6]
    """
    B, C_in, N = x.shape
    C7, c_in_w = weight.shape
    assert c_in_w == C_in and C7 % 7 == 0
    C_out = C7 // 7
    M = upconv_down_index.shape[0] // 2      # == 3N - 6

    # --- tiling: minimal padding, >=2 grid steps for megacore when possible ---
    tN, N_pad = _pick_tiling(N, B, lane_tile)
    x_p = jnp.pad(x, ((0, 0), (0, 0), (0, N_pad - N))) if N_pad != N else x

    # --- pre-permute Linear rows: new row (c*7 + k) <- old row (k*C_out + c) ---
    perm = (jnp.arange(7, dtype=jnp.int32)[None, :] * C_out
            + jnp.arange(C_out, dtype=jnp.int32)[:, None]).reshape(-1)
    w_p = weight[perm]                       # [7*C_out, C_in], channel-major rows
    b_p = bias[perm].reshape(C7, 1)

    # raise scoped-VMEM limit only when the double-buffered working set is big
    vmem_bytes = 2 * 4 * (C_in * tN + C7 * C_in + C7 + C7 * tN) + (1 << 20)
    cp_kwargs = {}
    if vmem_bytes > 14 * (1 << 20):
        cp_kwargs["vmem_limit_bytes"] = min(vmem_bytes + (4 << 20), 64 * (1 << 20))

    # yP[b, c*7 + k, n] == Linear(x)[b, n, k*C_out + c]
    yP = pl.pallas_call(
        _upconv_linear_kernel,
        out_shape=jax.ShapeDtypeStruct((B, C7, N_pad), x.dtype),
        grid_spec=pltpu.PrefetchScalarGridSpec(
            num_scalar_prefetch=0,
            grid=(B, N_pad // tN),
            in_specs=[
                pl.BlockSpec((None, C_in, tN), lambda b, j: (b, 0, j)),  # x tile
                pl.BlockSpec((C7, C_in), lambda b, j: (0, 0)),           # weight
                pl.BlockSpec((C7, 1), lambda b, j: (0, 0)),              # bias col
            ],
            out_specs=pl.BlockSpec((None, C7, tN), lambda b, j: (b, 0, j)),
        ),
        compiler_params=pltpu.CompilerParams(
            dimension_semantics=("parallel", "parallel"),
            **cp_kwargs,
        ),
    )(x_p, w_p, b_p)

    # ---- upconv gather glue: single-axis 1-D takes on a FREE reshape of yP ----
    # rows[b, r, c] == yR[b, c, (r % 7) * N_pad + r // 7]
    # TODO(synk): fully fuse this gather/pair-mean into the kernel (whole-mesh x
    # resident in VMEM + SMEM-prefetched indices) to also drop the yP HBM round
    # trip for small meshes.
    yR = yP.reshape(B, C_out, 7 * N_pad)

    def to_pos(r):
        r = r.astype(jnp.int32)
        return (r % 7) * N_pad + r // 7

    top = upconv_top_index.astype(jnp.int32)
    down = upconv_down_index.astype(jnp.int32)

    out_top = jnp.take(yR, to_pos(top), axis=2)                    # [B, C_out, N]

    # Replicate torch's rows[:, down, :].view(B, M, C_out, 2).mean(-1) exactly:
    #   gcat[b, q, m]     = rows[b, down[2m + q // C_out], q % C_out]
    #   out_down[b, c, m] = 0.5 * (gcat[b, 2c, m] + gcat[b, 2c + 1, m])
    g0 = jnp.take(yR, to_pos(down[0::2]), axis=2)                  # [B, C_out, M]
    g1 = jnp.take(yR, to_pos(down[1::2]), axis=2)                  # [B, C_out, M]
    gcat = jnp.concatenate([g0, g1], axis=1)                       # [B, 2*C_out, M]
    out_down = gcat.reshape(B, C_out, 2, M).mean(
        axis=2, dtype=jnp.float32).astype(x.dtype)                 # [B, C_out, M]

    return jnp.concatenate([out_top, out_down], axis=2)            # [B, C_out, N+M]


if __name__ == "__main__":
    key = jax.random.PRNGKey(0)
    B, C_in, C_out, N = 2, 4, 8, 42          # icosphere level-1 has 42 vertices
    new_N = 4 * N - 6                        # 162
    M = 3 * N - 6                            # 120
    C7 = 7 * C_out

    k1, k2, k3, k4, k5 = jax.random.split(key, 5)
    x = jax.random.normal(k1, (B, C_in, N), dtype=jnp.float32)
    upconv_top_index = jax.random.randint(k2, (N,), 0, 7 * N, dtype=jnp.int32)
    upconv_down_index = jax.random.randint(k3, (2 * M,), 0, 7 * N, dtype=jnp.int32)

    # torch nn.Linear-style init (uniform +-1/sqrt(fan_in)); weight is [out, in].
    bound = 1.0 / (C_in ** 0.5)
    weight = jax.random.uniform(k4, (C7, C_in), minval=-bound, maxval=bound,
                                dtype=jnp.float32)
    bias = jax.random.uniform(k5, (C7,), minval=-bound, maxval=bound,
                              dtype=jnp.float32)

    out = upconv_layer_batch_fwd(x, weight, bias, upconv_top_index,
                                 upconv_down_index)
    out = jax.block_until_ready(out)

    # Pure-JAX reference mirroring the PyTorch forward literally.
    xp = jnp.transpose(x, (0, 2, 1))                       # [B, N, C_in]
    y = xp @ weight.T + bias                               # [B, N, 7*C_out]
    rows = y.reshape(B, 7 * N, C_out)
    x1 = rows[:, upconv_top_index, :]                      # [B, N, C_out]
    x2 = rows[:, upconv_down_index, :].reshape(B, M, C_out, 2)
    ref = jnp.concatenate([x1, x2.mean(axis=3)], axis=1)   # [B, 4N-6, C_out]
    ref = jnp.transpose(ref, (0, 2, 1))                    # [B, C_out, 4N-6]

    assert out.shape == (B, C_out, new_N)
    assert jnp.allclose(out, ref, atol=1e-4, rtol=1e-4)
    print("KERNEL_OK")
</pallas_src>

<mosaic_0001>
module attributes {stable_mosaic.version = 11 : i64} {
  func.func @_upconv_linear_kernel(%arg0: i32, %arg1: i32, %arg2: memref<1x4x128xf32, #tpu.memory_space<vmem>>, %arg3: memref<56x4xf32, #tpu.memory_space<vmem>>, %arg4: memref<56x1xf32, #tpu.memory_space<vmem>>, %arg5: memref<1x56x128xf32, #tpu.memory_space<vmem>>) attributes {dimension_semantics = [#tpu.dimension_semantics<parallel>, #tpu.dimension_semantics<parallel>], iteration_bounds = array<i64: 2, 1>, scalar_prefetch = 0 : i64, scratch_operands = 0 : i64, tpu.core_type = #tpu.core_type<tc>, window_params = [{transform_indices = @transform_0, window_bounds = array<i64: 1, 4, 128>}, {pipeline_mode = #tpu.pipeline_mode<synchronous>, transform_indices = @transform_1, window_bounds = array<i64: 56, 4>}, {pipeline_mode = #tpu.pipeline_mode<synchronous>, transform_indices = @transform_2, window_bounds = array<i64: 56, 1>}, {transform_indices = @transform_3, window_bounds = array<i64: 1, 56, 128>}]} {
    %c0 = arith.constant 0 : index
    %c0_0 = arith.constant 0 : index
    %0 = vector.load %arg3[%c0, %c0_0] : memref<56x4xf32, #tpu.memory_space<vmem>>, vector<56x4xf32>
    %c0_1 = arith.constant 0 : index
    %c0_2 = arith.constant 0 : index
    %c0_3 = arith.constant 0 : index
    %1 = vector.load %arg2[%c0_1, %c0_2, %c0_3] : memref<1x4x128xf32, #tpu.memory_space<vmem>>, vector<1x4x128xf32>
    %2 = vector.shape_cast %1 : vector<1x4x128xf32> to vector<4x128xf32>
    %cst = arith.constant dense<0.000000e+00> : vector<56x128xf32>
    %3 = tpu.matmul %0, %2, %cst {dimension_numbers = #tpu.dot_dimension_numbers<[1], [0], [0], [1], [0, 0, 1, 1], [], []>} : vector<56x4xf32>, vector<4x128xf32>, vector<56x128xf32> -> vector<56x128xf32>
    %c0_4 = arith.constant 0 : index
    %c0_5 = arith.constant 0 : index
    %4 = vector.load %arg4[%c0_4, %c0_5] : memref<56x1xf32, #tpu.memory_space<vmem>>, vector<56x1xf32>
    %5 = vector.broadcast %4 : vector<56x1xf32> to vector<56x128xf32>
    %6 = arith.addf %3, %5 : vector<56x128xf32>
    %c0_6 = arith.constant 0 : index
    %c0_7 = arith.constant 0 : index
    %c0_8 = arith.constant 0 : index
    %7 = vector.load %arg5[%c0_6, %c0_7, %c0_8] : memref<1x56x128xf32, #tpu.memory_space<vmem>>, vector<1x56x128xf32>
    %8 = vector.shape_cast %7 : vector<1x56x128xf32> to vector<56x128xf32>
    %9 = vector.shape_cast %6 : vector<56x128xf32> to vector<1x56x128xf32>
    tpu.vector_store %arg5[%c0_6, %c0_7, %c0_8], %9 {strides = array<i32>} : memref<1x56x128xf32, #tpu.memory_space<vmem>>, vector<1x56x128xf32>,
    return
  }
  func.func @transform_0(%arg0: i32, %arg1: i32) -> (i32, i32, i32) {
    %c0_i32 = arith.constant 0 : i32
    %c0_i32_0 = arith.constant 0 : i32
    return %arg0, %c0_i32, %arg1 : i32, i32, i32
  }
  func.func @transform_1(%arg0: i32, %arg1: i32) -> (i32, i32) {
    %c0_i32 = arith.constant 0 : i32
    %c0_i32_0 = arith.constant 0 : i32
    %c0_i32_1 = arith.constant 0 : i32
    return %c0_i32, %c0_i32_0 : i32, i32
  }
  func.func @transform_2(%arg0: i32, %arg1: i32) -> (i32, i32) {
    %c0_i32 = arith.constant 0 : i32
    %c0_i32_0 = arith.constant 0 : i32
    %c0_i32_1 = arith.constant 0 : i32
    return %c0_i32, %c0_i32_0 : i32, i32
  }
  func.func @transform_3(%arg0: i32, %arg1: i32) -> (i32, i32, i32) {
    %c0_i32 = arith.constant 0 : i32
    %c0_i32_0 = arith.constant 0 : i32
    return %arg0, %c0_i32, %arg1 : i32, i32, i32
  }
}

</mosaic_0001>

<llo_original>
// kernel: tpu_custom_call.1
$region0: #{tpu_custom_call.1}
  #allocation0 [shape = 'u32[]', space=smem, size = 0x4, offset = 0x4, fixed_abs, tag = 'smem constant byte address 0x4 - core index']
  #allocation1 [shape = 'u32[144,128]{1,0:T(1,128)}', space=vmem, size = 0x12000, scoped, tag = 'internal scratch']
  %s0 = inlined_call_operand.vmem [shape: f32[2,4,128], index: 0, kind: input, shape index: {}]
  %s1 = inlined_call_operand.vmem [shape: f32[56,4], index: 1, kind: input, shape index: {}]
  %s2 = inlined_call_operand.vmem [shape: f32[56,1], index: 2, kind: input, shape index: {}]
  %s3 = inlined_call_operand.hbm [shape: f32[2,56,128], index: 3, kind: output, shape index: {}]
  %s4 = sld [smem:[#allocation0]]
  $region45: #{tpu_custom_call.1} parent=0
    _
  %s6 = ssub.s32 1, %s4
  %s7 = scalar_select 0, %s6, %s4
  $region1: #{tpu_custom_call.1} parent=0
    #allocation2 [shape = 'u8[57344]{0}', space=vmem, size = 0xe000, scoped, tag = 'output window, operand 0']
    #allocation3 [shape = 's32[2]{0}', space=sflag, size = 0x8, scoped, tag = 'scoped memory for tpu_custom_call.1']
    %8 = vsyncpa [#allocation3], 0
    %s9 = scalar_lea.sflag [#allocation3], 1
    %10 = vsyncpa %s9, 0
    loop: start=0, step=1, limit=4
    $region2: #{tpu_custom_call.1} parent=1 // loop_pre_header
      _
    $region3: #{tpu_custom_call.1} parent=1 // loop_header
      %s12 = sphi 0, %s16
      %p13 = scmp.ge.s32.totalorder %s12, 4
      %s19 = sphi 0, %s31
      %s20 = sphi 0, %s27
      %s21 = sphi 0, %s19
      %s22 = sphi 0, %s20
      %s23 = sphi 0, %s21
      %s24 = sphi 0, %s22
      %s36 = sphi 0, %s38
      %s39 = sphi 0, %s36
      %s40 = sphi 0, %s39
      %s56 = sphi 0, %s40
      %s60 = sphi 0, %s60
      %s62 = sphi 0, %s60
      %s63 = sphi 0, %s62
      %s77 = sphi 0, %s63
      %s81 = sphi 0, %s81
      %s83 = sphi 0, %s81
      %s84 = sphi 0, %s83
      %s98 = sphi 0, %s84
      %s106 = sphi 0, %s108
      %s109 = sphi 0, %s106
      %s110 = sphi 0, %s109
      %s126 = sphi 0, %s110
    $region4: #{tpu_custom_call.1} parent=1 // loop_header_branch
      %15 = sbr.rel (%p13) target = $region8
    $region5: #{tpu_custom_call.1} parent=1 // loop_body
      %s17 = ssub.s32 %s12, 1
      %s18 = ssub.s32 %s12, 2
      %s25 = sadd.s32 1, %s20
      %p26 = scmp.ge.s32.totalorder %s25, 1
      %s27 = scalar_select %p26, 0, %s25
      %s28 = sadd.s32 1, %s19
      %s29 = scalar_select %p26, %s28, %s19
      %p30 = scmp.ge.s32.totalorder %s29, 2
      %s31 = scalar_select %p30, 0, %s29
      %s32 = ssub.s32 %s19, %s31
      %s33 = ssub.s32 %s20, %s27
      %s34 = sor.u32 %s32, %s33
      %p35 = scmp.eq.s32.totalorder %s34, 0
      %s37 = sadd.s32 %s36, 1
      %s38 = scalar_select %p35, %s36, %s37
      %p41 = pneg %p35
      %p42 = scmp.eq.s32.totalorder %s12, 1
      %p43 = por %p41, %p42
      %p44 = scmp.ne.s32.totalorder %s36, %s39
      %p45 = scmp.eq.s32.totalorder %s12, 0
      %p46 = por %p44, %p45
      %p47 = scmp.ne.s32.totalorder %s36, %s39
      %p48 = scmp.eq.s32.totalorder %s17, 1
      %p49 = por %p47, %p48
      %p50 = scmp.ne.s32.totalorder %s39, %s40
      %p51 = scmp.eq.s32.totalorder %s17, 0
      %p52 = por %p50, %p51
      %p53 = scmp.ne.s32.totalorder %s39, %s40
      %p54 = scmp.eq.s32.totalorder %s18, 1
      %p55 = por %p53, %p54
      %p57 = scmp.ne.s32.totalorder %s40, %s56
      %p58 = scmp.eq.s32.totalorder %s18, 0
      %p59 = por %p57, %p58
      %s61 = sadd.s32 %s60, 1
      %p64 = scmp.eq.s32.totalorder %s12, 1
      %p65 = scmp.ne.s32.totalorder %s60, %s62
      %p66 = scmp.eq.s32.totalorder %s12, 0
      %p67 = por %p65, %p66
      %p68 = scmp.ne.s32.totalorder %s60, %s62
      %p69 = scmp.eq.s32.totalorder %s17, 1
      %p70 = por %p68, %p69
      %p71 = scmp.ne.s32.totalorder %s62, %s63
      %p72 = scmp.eq.s32.totalorder %s17, 0
      %p73 = por %p71, %p72
      %p74 = scmp.ne.s32.totalorder %s62, %s63
      %p75 = scmp.eq.s32.totalorder %s18, 1
      %p76 = por %p74, %p75
      %p78 = scmp.ne.s32.totalorder %s63, %s77
      %p79 = scmp.eq.s32.totalorder %s18, 0
      %p80 = por %p78, %p79
      %s82 = sadd.s32 %s81, 1
      %p85 = scmp.eq.s32.totalorder %s12, 1
      %p86 = scmp.ne.s32.totalorder %s81, %s83
      %p87 = scmp.eq.s32.totalorder %s12, 0
      %p88 = por %p86, %p87
      %p89 = scmp.ne.s32.totalorder %s81, %s83
      %p90 = scmp.eq.s32.totalorder %s17, 1
      %p91 = por %p89, %p90
      %p92 = scmp.ne.s32.totalorder %s83, %s84
      %p93 = scmp.eq.s32.totalorder %s17, 0
      %p94 = por %p92, %p93
      %p95 = scmp.ne.s32.totalorder %s83, %s84
      %p96 = scmp.eq.s32.totalorder %s18, 1
      %p97 = por %p95, %p96
      %p99 = scmp.ne.s32.totalorder %s84, %s98
      %p100 = scmp.eq.s32.totalorder %s18, 0
      %p101 = por %p99, %p100
      %s102 = ssub.s32 %s19, %s31
      %s103 = ssub.s32 %s20, %s27
      %s104 = sor.u32 %s102, %s103
      %p105 = scmp.eq.s32.totalorder %s104, 0
      %s107 = sadd.s32 %s106, 1
      %s108 = scalar_select %p105, %s106, %s107
      %p111 = pneg %p105
      %p112 = scmp.eq.s32.totalorder %s12, 1
      %p113 = por %p111, %p112
      %p114 = scmp.ne.s32.totalorder %s106, %s109
      %p115 = scmp.eq.s32.totalorder %s12, 0
      %p116 = por %p114, %p115
      %p117 = scmp.ne.s32.totalorder %s106, %s109
      %p118 = scmp.eq.s32.totalorder %s17, 1
      %p119 = por %p117, %p118
      %p120 = scmp.ne.s32.totalorder %s109, %s110
      %p121 = scmp.eq.s32.totalorder %s17, 0
      %p122 = por %p120, %p121
      %p123 = scmp.ne.s32.totalorder %s109, %s110
      %p124 = scmp.eq.s32.totalorder %s18, 1
      %p125 = por %p123, %p124
      %p127 = scmp.ne.s32.totalorder %s110, %s126
      %p128 = scmp.eq.s32.totalorder %s18, 0
      %p129 = por %p127, %p128
      %p130 = scmp.le.s32.totalorder 1, %s12
      %p131 = scmp.lt.s32.totalorder %s12, 3
      %p132 = pnand %p130, %p131
      %p133 = pneg %p132
      // Predicated region
      $region9: #{tpu_custom_call.1} parent=5 // pred_check
        _
      $region10: #{tpu_custom_call.1} parent=5 // pred_check_branch
        %135 = sbr.rel (%p132) target = $region12
      $region11: #{tpu_custom_call.1} parent=5 // pred_region
        %s136 = ssub.s32 %s12, 1
        // Predicated region
        $region13: #{tpu_custom_call.1} parent=11 // pred_check
          %p137 = pneg %p73
        $region14: #{tpu_custom_call.1} parent=11 // pred_check_branch
          %139 = sbr.rel (%p137) target = $region16
        $region15: #{tpu_custom_call.1} parent=11 // pred_region
          _
        $region16: #{tpu_custom_call.1} parent=11 // pred_fallthru
          _
        // Predicated region
        $region17: #{tpu_custom_call.1} parent=11 // pred_check
          %p140 = pneg %p94
        $region18: #{tpu_custom_call.1} parent=11 // pred_check_branch
          %142 = sbr.rel (%p140) target = $region20
        $region19: #{tpu_custom_call.1} parent=11 // pred_region
          _
        $region20: #{tpu_custom_call.1} parent=11 // pred_fallthru
          _
      $region12: #{tpu_custom_call.1} parent=5 // pred_fallthru
        _
      %p143 = scmp.lt.s32.totalorder %s12, 2
      // Predicated region
      $region21: #{tpu_custom_call.1} parent=5 // pred_check
        %p144 = pneg %p143
      $region22: #{tpu_custom_call.1} parent=5 // pred_check_branch
        %146 = sbr.rel (%p144) target = $region24
      $region23: #{tpu_custom_call.1} parent=5 // pred_region
        // Predicated region
        $region25: #{tpu_custom_call.1} parent=23 // pred_check
          %p147 = pneg %p46
        $region26: #{tpu_custom_call.1} parent=23 // pred_check_branch
          %149 = sbr.rel (%p147) target = $region28
        $region27: #{tpu_custom_call.1} parent=23 // pred_region
          %p150 = scmp.lt.s32.totalorder %s19, 1
          %s151 = scalar_select %p150, %s19, 1
          %p152 = scmp.lt.s32.totalorder %s20, 0
          %s153 = scalar_select %p152, %s20, 0
          %s154 = sadd.s32 %s153, %s151
          %s155 = smul.addr %s154, 4
          %s156 = scalar_lea.vmem %s0, %s155
        $region28: #{tpu_custom_call.1} parent=23 // pred_fallthru
          _
      $region24: #{tpu_custom_call.1} parent=5 // pred_fallthru
        _
      %p157 = scmp.le.s32.totalorder 1, %s12
      %p158 = scmp.lt.s32.totalorder %s12, 3
      %p159 = pnand %p157, %p158
      %p160 = pneg %p159
      // Predicated region
      $region29: #{tpu_custom_call.1} parent=5 // pred_check
        _
      $region30: #{tpu_custom_call.1} parent=5 // pred_check_branch
        %162 = sbr.rel (%p159) target = $region32
      $region31: #{tpu_custom_call.1} parent=5 // pred_region
        %s163 = ssub.s32 %s12, 1
        %p164 = scmp.lt.s32.totalorder %s21, 1
        %s165 = scalar_select %p164, %s21, 1
        %p166 = scmp.lt.s32.totalorder %s22, 0
        %s167 = scalar_select %p166, %s22, 0
        %s168 = sadd.s32 %s167, %s165
        %s169 = smul.addr %s168, 4
        %s170 = scalar_lea.vmem %s0, %s169
        %p171 = pneg %p52
        %p172 = pneg %p49
        %p173 = pneg %p73
        %p174 = pneg %p70
        %p175 = pneg %p94
        %p176 = pneg %p91
        %p177 = pneg %p122
        %p178 = pneg %p119
        %s179 = sand.u32 %s109, 1
        %s180 = scalar_lea.sflag [#allocation3], %s179
        %s181 = sand.u32 %s109, 1
        %s182 = smul.addr %s181, 56
        %s183 = scalar_lea.vmem [#allocation2], %s182
        %p184 = scmp.lt.s32.totalorder %s21, 1
        %s185 = scalar_select %p184, %s21, 1
        %p186 = scmp.lt.s32.totalorder %s22, 0
        %s187 = scalar_select %p186, %s22, 0
        %s188 = sadd.s32 %s187, %s185
        %s189 = smul.addr %s188, 4
        %s190 = scalar_lea.vmem %s0, %s189
        %v191 = vld [vmem:[%s1] sm:$0xff]
        %v192 = vld [vmem:[%s1 + $0x8] sm:$0xff]
        %v193 = vld [vmem:[%s1 + $0x10] sm:$0xff]
        %v194 = vld [vmem:[%s1 + $0x18] sm:$0xff]
        %v195 = vld [vmem:[%s1 + $0x20] sm:$0xff]
        %v196 = vld [vmem:[%s1 + $0x28] sm:$0xff]
        %v197 = vld [vmem:[%s1 + $0x30] sm:$0xff]
        %v198 = vld [vmem:[%s190] sm:$0xf]
        %v199 = vld [vmem:[%s2] sm:$0xff]
        %v200 = vld [vmem:[%s2 + $0x8] sm:$0xff]
        %v201 = vld [vmem:[%s2 + $0x10] sm:$0xff]
        %v202 = vld [vmem:[%s2 + $0x18] sm:$0xff]
        %v203 = vld [vmem:[%s2 + $0x20] sm:$0xff]
        %v204 = vld [vmem:[%s2 + $0x28] sm:$0xff]
        %v205 = vld [vmem:[%s2 + $0x30] sm:$0xff]
        %207 = vset.pattern.permute.xlu0 0
        %208 = vperm.xlu0 %207, %v199
        %v209 = vpop.permute.xlu0 %208
        %212 = vset.pattern.permute.xlu0 0
        %213 = vperm.xlu0 %212, %v200
        %v214 = vpop.permute.xlu0 %213
        %217 = vset.pattern.permute.xlu0 0
        %218 = vperm.xlu0 %217, %v201
        %v219 = vpop.permute.xlu0 %218
        %222 = vset.pattern.permute.xlu0 0
        %223 = vperm.xlu0 %222, %v202
        %v224 = vpop.permute.xlu0 %223
        %227 = vset.pattern.permute.xlu0 0
        %228 = vperm.xlu0 %227, %v203
        %v229 = vpop.permute.xlu0 %228
        %232 = vset.pattern.permute.xlu0 0
        %233 = vperm.xlu0 %232, %v204
        %v234 = vpop.permute.xlu0 %233
        %237 = vset.pattern.permute.xlu0 0
        %238 = vperm.xlu0 %237, %v205
        %v239 = vpop.permute.xlu0 %238
        %vm241 = vcmask 31744
        %v243 = vsel %vm241, %v191, 0
        %v246 = vsel %vm241, %v192, 0
        %v249 = vsel %vm241, %v193, 0
        %v252 = vsel %vm241, %v194, 0
        %v255 = vsel %vm241, %v195, 0
        %v258 = vsel %vm241, %v196, 0
        %v261 = vsel %vm241, %v197, 0
        %vm263 = vcmask 1043456
        %v265 = vsel %vm263, %v198, 0
        %267 = vmatprep.subr.mxu0 0.0
        %268 = vmatpush1.msra.mxu0 %v265
        %269 = vmatprep.subr.mxu0 0.0
        %270 = vmatpush1.msra.mxu0 0.0
        %271 = vmatprep.subr.mxu0 0.0
        %272 = vmatpush1.msra.mxu0 0.0
        %273 = vmatprep.subr.mxu0 0.0
        %274 = vmatpush1.msra.mxu0 0.0
        %275 = vmatprep.subr.mxu0 0.0
        %276 = vmatpush1.msra.mxu0 0.0
        %277 = vmatprep.subr.mxu0 0.0
        %278 = vmatpush1.msra.mxu0 0.0
        %279 = vmatprep.subr.mxu0 0.0
        %280 = vmatpush1.msra.mxu0 0.0
        %281 = vmatprep.subr.mxu0 0.0
        %282 = vmatpush1.msra.mxu0 0.0
        %283 = vmatprep.subr.mxu0 0.0
        %284 = vmatpush1.msra.mxu0 0.0
        %285 = vmatprep.subr.mxu0 0.0
        %286 = vmatpush1.msra.mxu0 0.0
        %287 = vmatprep.subr.mxu0 0.0
        %288 = vmatpush1.msra.mxu0 0.0
        %289 = vmatprep.subr.mxu0 0.0
        %290 = vmatpush1.msra.mxu0 0.0
        %291 = vmatprep.subr.mxu0 0.0
        %292 = vmatpush1.msra.mxu0 0.0
        %293 = vmatprep.subr.mxu0 0.0
        %294 = vmatpush1.msra.mxu0 0.0
        %295 = vmatprep.subr.mxu0 0.0
        %296 = vmatpush1.msra.mxu0 0.0
        %297 = vmatprep.subr.mxu0 0.0
        %298 = vmatpush1.msra.mxu0 0.0
        %299 = vmatprep.subr.mxu0 0.0
        %300 = vmatpush1.msra.mxu0 0.0
        %301 = vmatprep.subr.mxu0 0.0
        %302 = vmatpush1.msra.mxu0 0.0
        %303 = vmatprep.subr.mxu0 0.0
        %304 = vmatpush1.msra.mxu0 0.0
        %305 = vmatprep.subr.mxu0 0.0
        %306 = vmatpush1.msra.mxu0 0.0
        %307 = vmatprep.subr.mxu0 0.0
        %308 = vmatpush1.msra.mxu0 0.0
        %309 = vmatprep.subr.mxu0 0.0
        %310 = vmatpush1.msra.mxu0 0.0
        %311 = vmatprep.subr.mxu0 0.0
        %312 = vmatpush1.msra.mxu0 0.0
        %313 = vmatprep.subr.mxu0 0.0
        %314 = vmatpush1.msra.mxu0 0.0
        %315 = vmatprep.subr.mxu0 0.0
        %316 = vmatpush1.msra.mxu0 0.0
        %317 = vmatprep.subr.mxu0 0.0
        %318 = vmatpush1.msra.mxu0 0.0
        %319 = vmatprep.subr.mxu0 0.0
        %320 = vmatpush1.msra.mxu0 0.0
        %321 = vmatprep.subr.mxu0 0.0
        %322 = vmatpush1.msra.mxu0 0.0
        %323 = vmatprep.subr.mxu0 0.0
        %324 = vmatpush1.msra.mxu0 0.0
        %325 = vmatprep.subr.mxu0 0.0
        %326 = vmatpush1.msra.mxu0 0.0
        %327 = vmatprep.subr.mxu0 0.0
        %328 = vmatpush1.msra.mxu0 0.0
        %329 = vmatprep.subr.mxu0 0.0
        %330 = vmatpush1.msra.mxu0 0.0
        %331 = vmatprep.mubr.f32.mxu0 0.0
        %332 = vmatmul.mubr.f32.gmra.mrb[0].mxu0 %v243
        %v333 = vpop.f32.mrb[0].mxu0
        %v334 = vadd.f32 %v209, %v333
        %v335 = vpop.f32.mrb[0].mxu0
        %336 = vmatprep.mubr.f32.mxu0 0.0
        %337 = vmatmul.mubr.f32.gmra.mrb[0].mxu0 %v246
        %v338 = vpop.f32.mrb[0].mxu0
        %v339 = vadd.f32 %v214, %v338
        %v340 = vpop.f32.mrb[0].mxu0
        %341 = vmatprep.mubr.f32.mxu0 0.0
        %342 = vmatmul.mubr.f32.gmra.mrb[0].mxu0 %v249
        %v343 = vpop.f32.mrb[0].mxu0
        %v344 = vadd.f32 %v219, %v343
        %v345 = vpop.f32.mrb[0].mxu0
        %346 = vmatprep.mubr.f32.mxu0 0.0
        %347 = vmatmul.mubr.f32.gmra.mrb[0].mxu0 %v252
        %v348 = vpop.f32.mrb[0].mxu0
        %v349 = vadd.f32 %v224, %v348
        %v350 = vpop.f32.mrb[0].mxu0
        %351 = vmatprep.mubr.f32.mxu0 0.0
        %352 = vmatmul.mubr.f32.gmra.mrb[0].mxu0 %v255
        %v353 = vpop.f32.mrb[0].mxu0
        %v354 = vadd.f32 %v229, %v353
        %v355 = vpop.f32.mrb[0].mxu0
        %356 = vmatprep.mubr.f32.mxu0 0.0
        %357 = vmatmul.mubr.f32.gmra.mrb[0].mxu0 %v258
        %v358 = vpop.f32.mrb[0].mxu0
        %v359 = vadd.f32 %v234, %v358
        %v360 = vpop.f32.mrb[0].mxu0
        %361 = vmatprep.mubr.f32.mxu0 0.0
        %362 = vmatmul.mubr.f32.gmra.mrb[0].mxu0 %v261
        %v363 = vpop.f32.mrb[0].mxu0
        %v364 = vadd.f32 %v239, %v363
        %v365 = vpop.f32.mrb[0].mxu0
        %366 = vdwg.mxu0
        %367 = vst [vmem:[%s183] sm:$0xff] %v334
        %368 = vst [vmem:[%s183 + $0x8] sm:$0xff] %v339
        %369 = vst [vmem:[%s183 + $0x10] sm:$0xff] %v344
        %370 = vst [vmem:[%s183 + $0x18] sm:$0xff] %v349
        %371 = vst [vmem:[%s183 + $0x20] sm:$0xff] %v354
        %372 = vst [vmem:[%s183 + $0x28] sm:$0xff] %v359
        %373 = vst [vmem:[%s183 + $0x30] sm:$0xff] %v364
        %s374 = sand.u32 %s109, 1
        %s375 = scalar_lea.sflag [#allocation3], %s374
        %s376 = sand.u32 %s109, 1
        %s377 = smul.addr %s376, 56
        %s378 = scalar_lea.vmem [#allocation2], %s377
        // Predicated region
        $region33: #{tpu_custom_call.1} parent=31 // pred_check
          %p379 = pneg %p119
        $region34: #{tpu_custom_call.1} parent=31 // pred_check_branch
          %381 = sbr.rel (%p379) target = $region36
        $region35: #{tpu_custom_call.1} parent=31 // pred_region
          %s383 = ssub.s32 896, 896
          %384 = vsyncadd %s375, %s383
          %s385 = smul.addr %s21, 7
          %s386 = sadd.s32 %s22, %s385
          %s387 = smul.addr %s386, 128
          %s388 = scalar_lea.hbm %s3, %s387
          %s389 = sshll.u32 %s378, 4
          %s390 = int_to_ptr.vmem [resolvable:$true] %s389
          %395 = dma.vmem_to_hbm [thread:$0]  %s390, 896, %s388, %s375, 128, 128, 8
        $region36: #{tpu_custom_call.1} parent=31 // pred_fallthru
          _
      $region32: #{tpu_custom_call.1} parent=5 // pred_fallthru
        _
      %p396 = scmp.le.s32.totalorder 2, %s12
      // Predicated region
      $region37: #{tpu_custom_call.1} parent=5 // pred_check
        %p397 = pneg %p396
      $region38: #{tpu_custom_call.1} parent=5 // pred_check_branch
        %399 = sbr.rel (%p397) target = $region40
      $region39: #{tpu_custom_call.1} parent=5 // pred_region
        %s400 = ssub.s32 %s12, 2
        // Predicated region
        $region41: #{tpu_custom_call.1} parent=39 // pred_check
          %p401 = pneg %p125
        $region42: #{tpu_custom_call.1} parent=39 // pred_check_branch
          %403 = sbr.rel (%p401) target = $region44
        $region43: #{tpu_custom_call.1} parent=39 // pred_region
          %s404 = sand.u32 %s110, 1
          %s405 = scalar_lea.sflag [#allocation3], %s404
          %s406 = sand.u32 %s110, 1
          %s407 = smul.addr %s406, 56
          %s408 = scalar_lea.vmem [#allocation2], %s407
          %409 = dma.done %s405, 896
        $region44: #{tpu_custom_call.1} parent=39 // pred_fallthru
          _
      $region40: #{tpu_custom_call.1} parent=5 // pred_fallthru
        _
    $region6: #{tpu_custom_call.1} parent=1 // loop_footer
      %s16 = sadd.s32 1, %s12
    $region7: #{tpu_custom_call.1} parent=1 // loop_footer_branch
      %11 = sbr.rel target = $region3
    $region8: #{tpu_custom_call.1} parent=1 // loop_exit
      _
    %410 = vsyncpa [#allocation3], 1
    %s411 = scalar_lea.sflag [#allocation3], 1
    %412 = vsyncpa %s411, 1

</llo_original>
